<compile_context>
chip_gen: v7x
topology: tpu7x:2x2x1
jax: 0.10.0
libtpu: 0.0.40
codegen_flags: <defaults>
</compile_context>

<pallas_src>
import jax
import jax.numpy as jnp
from jax.experimental import pallas as pl
from jax.experimental.pallas import tpu as pltpu

N_DIM = 32    # n : dimension of x
M_DIM = 8     # m : number of equality constraints (== parm_dim)
BATCH = 256   # small demo batch; 2 lane-dense tiles of 128


def _eq_constraint_kernel(a_ref, x_ref, p_ref, q_ref, r_ref, o_ref):
    m = q_ref.shape[0]

    X = x_ref[...]                                    # (n, Bt)  batch on lanes
    P = p_ref[...]                                    # (m, Bt)
    A = a_ref[...]                                    # (m, n)   shared across batch

    t = jnp.tanh(X)                                   # EUP
    U = (1.0 - t * t) * X - t                         # (n, Bt)
    # b = -F(x) + J_F(x) x = A @ ((1 - tanh^2 x) * x - tanh x) - p
    # Single real 2-D matmul (shared A) -> MXU.
    b = jnp.dot(A, U, preferred_element_type=jnp.float32) - P   # (m, Bt)

    # qx[i] = (Q^T x)_i per sample: elementwise (n, Bt) product + sublane reduce.
    qx = [jnp.sum(q_ref[i] * X, axis=0, keepdims=True)          # m x (1, Bt)
          for i in range(m)]

    # Solve R^T zeta = b (R upper triangular) by unrolled forward substitution
    # on lane-dense (1, Bt) rows; (R^T)[i, j] == R[j, i] == r_ref[j, i, :].
    zeta = []
    for i in range(m):
        num = b[i:i + 1, :]
        for j in range(i):
            num = num - r_ref[j, i:i + 1, :] * zeta[j]
        zeta.append(num / r_ref[i, i:i + 1, :])

    # out = x + Q (zeta - Q^T x)   [module's projection sequence, using Q^T Q = I]
    corr = jnp.zeros_like(X)
    for i in range(m):
        corr = corr + q_ref[i] * (zeta[i] - qx[i])    # (n,Bt) * (1,Bt) broadcast FMA
    o_ref[...] = (X + corr).astype(o_ref.dtype)


def F_single(x, p, A):
    """Unbatched F: R^n -> R^m."""
    return A @ jnp.tanh(x) + p


def _pick_b_tile(B):
    if B % 128 != 0:
        return B                       # single (possibly padded) tile for ragged batches
    for bt in (1024, 512, 256, 128):   # prefer >= 2 grid steps (v7x: both TCs busy)
        if B % bt == 0 and B // bt >= 2:
            return bt
    return B


def equality_constraint_forward(x, parms, A, b_tile=None):
    B, n = x.shape
    m = parms.shape[-1]
    f32 = jnp.float32
    x32 = x.astype(f32)
    p32 = parms.astype(f32)
    A32 = A.astype(f32)

    # ---- JF_fixed == False glue: analytic Jacobian + batched QR ----
    # J_F(x) = A * sech^2(x) rowwise  =>  J_F(x)^T = sech^2(x)[:, :, None] * A^T
    sech2 = 1.0 - jnp.tanh(x32) ** 2                     # (B, n)
    JFxT = sech2[:, :, None] * A32.T[None, :, :]         # (B, n, m)
    Q, R = jnp.linalg.qr(JFxT)                           # (B, n, m), (B, m, m)
    # TODO(synk): batched QR has no clean Pallas equivalent; it stays in XLA glue.

    # Lane-dense relayout: batch on the last (lane) dimension.
    xT = x32.T                                           # (n, B)
    pT = p32.T                                           # (m, B)
    Qt = jnp.transpose(Q, (2, 1, 0))                     # (m, n, B): Qt[i,k,b] = Q[b,k,i]
    Rt = jnp.transpose(R, (1, 2, 0))                     # (m, m, B): Rt[j,i,b] = R[b,j,i]

    if b_tile is None:
        b_tile = _pick_b_tile(B)
    assert B % b_tile == 0, "b_tile must divide the batch"
    grid = (B // b_tile,)

    cost = pl.CostEstimate(
        flops=B * (6 * m * n + 2 * m * m + 6 * n),
        transcendentals=B * n,
        bytes_accessed=4 * (B * (2 * n + m + m * n + m * m) + m * n),
    )

    outT = pl.pallas_call(
        _eq_constraint_kernel,
        out_shape=jax.ShapeDtypeStruct((n, B), x.dtype),
        grid=grid,
        in_specs=[
            pl.BlockSpec((m, n), lambda i: (0, 0)),             # A (shared, fetched once)
            pl.BlockSpec((n, b_tile), lambda i: (0, i)),        # x^T
            pl.BlockSpec((m, b_tile), lambda i: (0, i)),        # parms^T
            pl.BlockSpec((m, n, b_tile), lambda i: (0, 0, i)),  # Q, batch-minor
            pl.BlockSpec((m, m, b_tile), lambda i: (0, 0, i)),  # R, batch-minor
        ],
        out_specs=pl.BlockSpec((n, b_tile), lambda i: (0, i)),
        compiler_params=pltpu.CompilerParams(
            dimension_semantics=("parallel",)),
        cost_estimate=cost,
    )(A32, xT, pT, Qt, Rt)
    return outT.T                                        # (B, n)


def reference_forward(x, parms, A):
    """Pure-JAX mirror of the PyTorch forward (jacrev + full projection sequence)."""
    Fx = jax.vmap(F_single, in_axes=(0, 0, None))(x, parms, A)
    JFx = jax.vmap(jax.jacrev(F_single, argnums=0), in_axes=(0, 0, None))(x, parms, A)
    Q, R = jnp.linalg.qr(jnp.transpose(JFx, (0, 2, 1)))
    b = -Fx[..., None] + JFx @ x[..., None]
    zeta_r = jnp.linalg.solve(jnp.transpose(R, (0, 2, 1)), b)
    zeta = Q @ zeta_r
    z = x[..., None] - zeta
    zq = Q @ (jnp.transpose(Q, (0, 2, 1)) @ z)
    z = z - zq
    return jnp.squeeze(z + zeta, -1)


if __name__ == "__main__":
    key = jax.random.PRNGKey(0)
    k1, k2, k3 = jax.random.split(key, 3)
    # Deterministic synthetic "parameters" of F and inputs.
    A = jax.random.normal(k1, (M_DIM, N_DIM), jnp.float32) / jnp.sqrt(N_DIM)
    x = jax.random.normal(k2, (BATCH, N_DIM), jnp.float32)
    parms = jax.random.normal(k3, (BATCH, M_DIM), jnp.float32)

    out = equality_constraint_forward(x, parms, A)
    out = jax.block_until_ready(out)

    ref = reference_forward(x, parms, A)
    assert out.shape == (BATCH, N_DIM)
    max_err = float(jnp.max(jnp.abs(out - ref)))
    assert jnp.allclose(out, ref, atol=2e-3, rtol=2e-3), f"max abs err {max_err}"
    print("KERNEL_OK")
</pallas_src>

<mosaic_0001>
module attributes {stable_mosaic.version = 11 : i64} {
  func.func @_eq_constraint_kernel(%arg0: i32, %arg1: memref<8x32xf32, #tpu.memory_space<vmem>>, %arg2: memref<32x128xf32, #tpu.memory_space<vmem>>, %arg3: memref<8x128xf32, #tpu.memory_space<vmem>>, %arg4: memref<8x32x128xf32, #tpu.memory_space<vmem>>, %arg5: memref<8x8x128xf32, #tpu.memory_space<vmem>>, %arg6: memref<32x128xf32, #tpu.memory_space<vmem>>) attributes {dimension_semantics = [#tpu.dimension_semantics<parallel>], iteration_bounds = array<i64: 2>, scalar_prefetch = 0 : i64, scratch_operands = 0 : i64, tpu.core_type = #tpu.core_type<tc>, window_params = [{pipeline_mode = #tpu.pipeline_mode<synchronous>, transform_indices = @transform_0, window_bounds = array<i64: 8, 32>}, {transform_indices = @transform_1, window_bounds = array<i64: 32, 128>}, {transform_indices = @transform_2, window_bounds = array<i64: 8, 128>}, {transform_indices = @transform_3, window_bounds = array<i64: 8, 32, 128>}, {transform_indices = @transform_4, window_bounds = array<i64: 8, 8, 128>}, {transform_indices = @transform_5, window_bounds = array<i64: 32, 128>}]} {
    %c0 = arith.constant 0 : index
    %c0_0 = arith.constant 0 : index
    %0 = vector.load %arg2[%c0, %c0_0] : memref<32x128xf32, #tpu.memory_space<vmem>>, vector<32x128xf32>
    %c0_1 = arith.constant 0 : index
    %c0_2 = arith.constant 0 : index
    %1 = vector.load %arg3[%c0_1, %c0_2] : memref<8x128xf32, #tpu.memory_space<vmem>>, vector<8x128xf32>
    %c0_3 = arith.constant 0 : index
    %c0_4 = arith.constant 0 : index
    %2 = vector.load %arg1[%c0_3, %c0_4] : memref<8x32xf32, #tpu.memory_space<vmem>>, vector<8x32xf32>
    %3 = math.tanh %0 : vector<32x128xf32>
    %4 = arith.mulf %3, %3 : vector<32x128xf32>
    %cst = arith.constant 1.000000e+00 : f32
    %5 = vector.broadcast %cst : f32 to vector<32x128xf32>
    %6 = arith.subf %5, %4 : vector<32x128xf32>
    %7 = arith.mulf %6, %0 : vector<32x128xf32>
    %8 = arith.subf %7, %3 : vector<32x128xf32>
    %cst_5 = arith.constant dense<0.000000e+00> : vector<8x128xf32>
    %9 = tpu.matmul %2, %8, %cst_5 {dimension_numbers = #tpu.dot_dimension_numbers<[1], [0], [0], [1], [0, 0, 1, 1], [], []>} : vector<8x32xf32>, vector<32x128xf32>, vector<8x128xf32> -> vector<8x128xf32>
    %10 = arith.subf %9, %1 : vector<8x128xf32>
    %c0_6 = arith.constant 0 : index
    %c0_7 = arith.constant 0 : index
    %c0_8 = arith.constant 0 : index
    %11 = vector.load %arg4[%c0_6, %c0_7, %c0_8] : memref<8x32x128xf32, #tpu.memory_space<vmem>>, vector<1x32x128xf32>
    %12 = vector.shape_cast %11 : vector<1x32x128xf32> to vector<32x128xf32>
    %13 = arith.mulf %12, %0 : vector<32x128xf32>
    %cst_9 = arith.constant dense<0.000000e+00> : vector<128xf32>
    %14 = vector.multi_reduction <add>, %13, %cst_9 [0] : vector<32x128xf32> to vector<128xf32>
    %15 = vector.shape_cast %14 : vector<128xf32> to vector<1x128xf32>
    %c1 = arith.constant 1 : index
    %c0_10 = arith.constant 0 : index
    %c0_11 = arith.constant 0 : index
    %16 = vector.load %arg4[%c1, %c0_10, %c0_11] : memref<8x32x128xf32, #tpu.memory_space<vmem>>, vector<1x32x128xf32>
    %17 = vector.shape_cast %16 : vector<1x32x128xf32> to vector<32x128xf32>
    %18 = arith.mulf %17, %0 : vector<32x128xf32>
    %cst_12 = arith.constant dense<0.000000e+00> : vector<128xf32>
    %19 = vector.multi_reduction <add>, %18, %cst_12 [0] : vector<32x128xf32> to vector<128xf32>
    %20 = vector.shape_cast %19 : vector<128xf32> to vector<1x128xf32>
    %c2 = arith.constant 2 : index
    %c0_13 = arith.constant 0 : index
    %c0_14 = arith.constant 0 : index
    %21 = vector.load %arg4[%c2, %c0_13, %c0_14] : memref<8x32x128xf32, #tpu.memory_space<vmem>>, vector<1x32x128xf32>
    %22 = vector.shape_cast %21 : vector<1x32x128xf32> to vector<32x128xf32>
    %23 = arith.mulf %22, %0 : vector<32x128xf32>
    %cst_15 = arith.constant dense<0.000000e+00> : vector<128xf32>
    %24 = vector.multi_reduction <add>, %23, %cst_15 [0] : vector<32x128xf32> to vector<128xf32>
    %25 = vector.shape_cast %24 : vector<128xf32> to vector<1x128xf32>
    %c3 = arith.constant 3 : index
    %c0_16 = arith.constant 0 : index
    %c0_17 = arith.constant 0 : index
    %26 = vector.load %arg4[%c3, %c0_16, %c0_17] : memref<8x32x128xf32, #tpu.memory_space<vmem>>, vector<1x32x128xf32>
    %27 = vector.shape_cast %26 : vector<1x32x128xf32> to vector<32x128xf32>
    %28 = arith.mulf %27, %0 : vector<32x128xf32>
    %cst_18 = arith.constant dense<0.000000e+00> : vector<128xf32>
    %29 = vector.multi_reduction <add>, %28, %cst_18 [0] : vector<32x128xf32> to vector<128xf32>
    %30 = vector.shape_cast %29 : vector<128xf32> to vector<1x128xf32>
    %c4 = arith.constant 4 : index
    %c0_19 = arith.constant 0 : index
    %c0_20 = arith.constant 0 : index
    %31 = vector.load %arg4[%c4, %c0_19, %c0_20] : memref<8x32x128xf32, #tpu.memory_space<vmem>>, vector<1x32x128xf32>
    %32 = vector.shape_cast %31 : vector<1x32x128xf32> to vector<32x128xf32>
    %33 = arith.mulf %32, %0 : vector<32x128xf32>
    %cst_21 = arith.constant dense<0.000000e+00> : vector<128xf32>
    %34 = vector.multi_reduction <add>, %33, %cst_21 [0] : vector<32x128xf32> to vector<128xf32>
    %35 = vector.shape_cast %34 : vector<128xf32> to vector<1x128xf32>
    %c5 = arith.constant 5 : index
    %c0_22 = arith.constant 0 : index
    %c0_23 = arith.constant 0 : index
    %36 = vector.load %arg4[%c5, %c0_22, %c0_23] : memref<8x32x128xf32, #tpu.memory_space<vmem>>, vector<1x32x128xf32>
    %37 = vector.shape_cast %36 : vector<1x32x128xf32> to vector<32x128xf32>
    %38 = arith.mulf %37, %0 : vector<32x128xf32>
    %cst_24 = arith.constant dense<0.000000e+00> : vector<128xf32>
    %39 = vector.multi_reduction <add>, %38, %cst_24 [0] : vector<32x128xf32> to vector<128xf32>
    %40 = vector.shape_cast %39 : vector<128xf32> to vector<1x128xf32>
    %c6 = arith.constant 6 : index
    %c0_25 = arith.constant 0 : index
    %c0_26 = arith.constant 0 : index
    %41 = vector.load %arg4[%c6, %c0_25, %c0_26] : memref<8x32x128xf32, #tpu.memory_space<vmem>>, vector<1x32x128xf32>
    %42 = vector.shape_cast %41 : vector<1x32x128xf32> to vector<32x128xf32>
    %43 = arith.mulf %42, %0 : vector<32x128xf32>
    %cst_27 = arith.constant dense<0.000000e+00> : vector<128xf32>
    %44 = vector.multi_reduction <add>, %43, %cst_27 [0] : vector<32x128xf32> to vector<128xf32>
    %45 = vector.shape_cast %44 : vector<128xf32> to vector<1x128xf32>
    %c7 = arith.constant 7 : index
    %c0_28 = arith.constant 0 : index
    %c0_29 = arith.constant 0 : index
    %46 = vector.load %arg4[%c7, %c0_28, %c0_29] : memref<8x32x128xf32, #tpu.memory_space<vmem>>, vector<1x32x128xf32>
    %47 = vector.shape_cast %46 : vector<1x32x128xf32> to vector<32x128xf32>
    %48 = arith.mulf %47, %0 : vector<32x128xf32>
    %cst_30 = arith.constant dense<0.000000e+00> : vector<128xf32>
    %49 = vector.multi_reduction <add>, %48, %cst_30 [0] : vector<32x128xf32> to vector<128xf32>
    %50 = vector.shape_cast %49 : vector<128xf32> to vector<1x128xf32>
    %51 = vector.extract_strided_slice %10 {offsets = [0, 0], sizes = [1, 128], strides = [1, 1]} : vector<8x128xf32> to vector<1x128xf32>
    %c0_31 = arith.constant 0 : index
    %c0_32 = arith.constant 0 : index
    %c0_33 = arith.constant 0 : index
    %52 = vector.load %arg5[%c0_31, %c0_32, %c0_33] : memref<8x8x128xf32, #tpu.memory_space<vmem>>, vector<1x1x128xf32>
    %53 = vector.shape_cast %52 : vector<1x1x128xf32> to vector<1x128xf32>
    %54 = arith.divf %51, %53 : vector<1x128xf32>
    %55 = vector.extract_strided_slice %10 {offsets = [1, 0], sizes = [1, 128], strides = [1, 1]} : vector<8x128xf32> to vector<1x128xf32>
    %c0_34 = arith.constant 0 : index
    %c1_35 = arith.constant 1 : index
    %c0_36 = arith.constant 0 : index
    %56 = vector.load %arg5[%c0_34, %c1_35, %c0_36] : memref<8x8x128xf32, #tpu.memory_space<vmem>>, vector<1x1x128xf32>
    %57 = vector.shape_cast %56 : vector<1x1x128xf32> to vector<1x128xf32>
    %58 = arith.mulf %57, %54 : vector<1x128xf32>
    %59 = arith.subf %55, %58 : vector<1x128xf32>
    %c1_37 = arith.constant 1 : index
    %c1_38 = arith.constant 1 : index
    %c0_39 = arith.constant 0 : index
    %60 = vector.load %arg5[%c1_37, %c1_38, %c0_39] : memref<8x8x128xf32, #tpu.memory_space<vmem>>, vector<1x1x128xf32>
    %61 = vector.shape_cast %60 : vector<1x1x128xf32> to vector<1x128xf32>
    %62 = arith.divf %59, %61 : vector<1x128xf32>
    %63 = vector.extract_strided_slice %10 {offsets = [2, 0], sizes = [1, 128], strides = [1, 1]} : vector<8x128xf32> to vector<1x128xf32>
    %c0_40 = arith.constant 0 : index
    %c2_41 = arith.constant 2 : index
    %c0_42 = arith.constant 0 : index
    %64 = vector.load %arg5[%c0_40, %c2_41, %c0_42] : memref<8x8x128xf32, #tpu.memory_space<vmem>>, vector<1x1x128xf32>
    %65 = vector.shape_cast %64 : vector<1x1x128xf32> to vector<1x128xf32>
    %66 = arith.mulf %65, %54 : vector<1x128xf32>
    %67 = arith.subf %63, %66 : vector<1x128xf32>
    %c1_43 = arith.constant 1 : index
    %c2_44 = arith.constant 2 : index
    %c0_45 = arith.constant 0 : index
    %68 = vector.load %arg5[%c1_43, %c2_44, %c0_45] : memref<8x8x128xf32, #tpu.memory_space<vmem>>, vector<1x1x128xf32>
    %69 = vector.shape_cast %68 : vector<1x1x128xf32> to vector<1x128xf32>
    %70 = arith.mulf %69, %62 : vector<1x128xf32>
    %71 = arith.subf %67, %70 : vector<1x128xf32>
    %c2_46 = arith.constant 2 : index
    %c2_47 = arith.constant 2 : index
    %c0_48 = arith.constant 0 : index
    %72 = vector.load %arg5[%c2_46, %c2_47, %c0_48] : memref<8x8x128xf32, #tpu.memory_space<vmem>>, vector<1x1x128xf32>
    %73 = vector.shape_cast %72 : vector<1x1x128xf32> to vector<1x128xf32>
    %74 = arith.divf %71, %73 : vector<1x128xf32>
    %75 = vector.extract_strided_slice %10 {offsets = [3, 0], sizes = [1, 128], strides = [1, 1]} : vector<8x128xf32> to vector<1x128xf32>
    %c0_49 = arith.constant 0 : index
    %c3_50 = arith.constant 3 : index
    %c0_51 = arith.constant 0 : index
    %76 = vector.load %arg5[%c0_49, %c3_50, %c0_51] : memref<8x8x128xf32, #tpu.memory_space<vmem>>, vector<1x1x128xf32>
    %77 = vector.shape_cast %76 : vector<1x1x128xf32> to vector<1x128xf32>
    %78 = arith.mulf %77, %54 : vector<1x128xf32>
    %79 = arith.subf %75, %78 : vector<1x128xf32>
    %c1_52 = arith.constant 1 : index
    %c3_53 = arith.constant 3 : index
    %c0_54 = arith.constant 0 : index
    %80 = vector.load %arg5[%c1_52, %c3_53, %c0_54] : memref<8x8x128xf32, #tpu.memory_space<vmem>>, vector<1x1x128xf32>
    %81 = vector.shape_cast %80 : vector<1x1x128xf32> to vector<1x128xf32>
    %82 = arith.mulf %81, %62 : vector<1x128xf32>
    %83 = arith.subf %79, %82 : vector<1x128xf32>
    %c2_55 = arith.constant 2 : index
    %c3_56 = arith.constant 3 : index
    %c0_57 = arith.constant 0 : index
    %84 = vector.load %arg5[%c2_55, %c3_56, %c0_57] : memref<8x8x128xf32, #tpu.memory_space<vmem>>, vector<1x1x128xf32>
    %85 = vector.shape_cast %84 : vector<1x1x128xf32> to vector<1x128xf32>
    %86 = arith.mulf %85, %74 : vector<1x128xf32>
    %87 = arith.subf %83, %86 : vector<1x128xf32>
    %c3_58 = arith.constant 3 : index
    %c3_59 = arith.constant 3 : index
    %c0_60 = arith.constant 0 : index
    %88 = vector.load %arg5[%c3_58, %c3_59, %c0_60] : memref<8x8x128xf32, #tpu.memory_space<vmem>>, vector<1x1x128xf32>
    %89 = vector.shape_cast %88 : vector<1x1x128xf32> to vector<1x128xf32>
    %90 = arith.divf %87, %89 : vector<1x128xf32>
    %91 = vector.extract_strided_slice %10 {offsets = [4, 0], sizes = [1, 128], strides = [1, 1]} : vector<8x128xf32> to vector<1x128xf32>
    %c0_61 = arith.constant 0 : index
    %c4_62 = arith.constant 4 : index
    %c0_63 = arith.constant 0 : index
    %92 = vector.load %arg5[%c0_61, %c4_62, %c0_63] : memref<8x8x128xf32, #tpu.memory_space<vmem>>, vector<1x1x128xf32>
    %93 = vector.shape_cast %92 : vector<1x1x128xf32> to vector<1x128xf32>
    %94 = arith.mulf %93, %54 : vector<1x128xf32>
    %95 = arith.subf %91, %94 : vector<1x128xf32>
    %c1_64 = arith.constant 1 : index
    %c4_65 = arith.constant 4 : index
    %c0_66 = arith.constant 0 : index
    %96 = vector.load %arg5[%c1_64, %c4_65, %c0_66] : memref<8x8x128xf32, #tpu.memory_space<vmem>>, vector<1x1x128xf32>
    %97 = vector.shape_cast %96 : vector<1x1x128xf32> to vector<1x128xf32>
    %98 = arith.mulf %97, %62 : vector<1x128xf32>
    %99 = arith.subf %95, %98 : vector<1x128xf32>
    %c2_67 = arith.constant 2 : index
    %c4_68 = arith.constant 4 : index
    %c0_69 = arith.constant 0 : index
    %100 = vector.load %arg5[%c2_67, %c4_68, %c0_69] : memref<8x8x128xf32, #tpu.memory_space<vmem>>, vector<1x1x128xf32>
    %101 = vector.shape_cast %100 : vector<1x1x128xf32> to vector<1x128xf32>
    %102 = arith.mulf %101, %74 : vector<1x128xf32>
    %103 = arith.subf %99, %102 : vector<1x128xf32>
    %c3_70 = arith.constant 3 : index
    %c4_71 = arith.constant 4 : index
    %c0_72 = arith.constant 0 : index
    %104 = vector.load %arg5[%c3_70, %c4_71, %c0_72] : memref<8x8x128xf32, #tpu.memory_space<vmem>>, vector<1x1x128xf32>
    %105 = vector.shape_cast %104 : vector<1x1x128xf32> to vector<1x128xf32>
    %106 = arith.mulf %105, %90 : vector<1x128xf32>
    %107 = arith.subf %103, %106 : vector<1x128xf32>
    %c4_73 = arith.constant 4 : index
    %c4_74 = arith.constant 4 : index
    %c0_75 = arith.constant 0 : index
    %108 = vector.load %arg5[%c4_73, %c4_74, %c0_75] : memref<8x8x128xf32, #tpu.memory_space<vmem>>, vector<1x1x128xf32>
    %109 = vector.shape_cast %108 : vector<1x1x128xf32> to vector<1x128xf32>
    %110 = arith.divf %107, %109 : vector<1x128xf32>
    %111 = vector.extract_strided_slice %10 {offsets = [5, 0], sizes = [1, 128], strides = [1, 1]} : vector<8x128xf32> to vector<1x128xf32>
    %c0_76 = arith.constant 0 : index
    %c5_77 = arith.constant 5 : index
    %c0_78 = arith.constant 0 : index
    %112 = vector.load %arg5[%c0_76, %c5_77, %c0_78] : memref<8x8x128xf32, #tpu.memory_space<vmem>>, vector<1x1x128xf32>
    %113 = vector.shape_cast %112 : vector<1x1x128xf32> to vector<1x128xf32>
    %114 = arith.mulf %113, %54 : vector<1x128xf32>
    %115 = arith.subf %111, %114 : vector<1x128xf32>
    %c1_79 = arith.constant 1 : index
    %c5_80 = arith.constant 5 : index
    %c0_81 = arith.constant 0 : index
    %116 = vector.load %arg5[%c1_79, %c5_80, %c0_81] : memref<8x8x128xf32, #tpu.memory_space<vmem>>, vector<1x1x128xf32>
    %117 = vector.shape_cast %116 : vector<1x1x128xf32> to vector<1x128xf32>
    %118 = arith.mulf %117, %62 : vector<1x128xf32>
    %119 = arith.subf %115, %118 : vector<1x128xf32>
    %c2_82 = arith.constant 2 : index
    %c5_83 = arith.constant 5 : index
    %c0_84 = arith.constant 0 : index
    %120 = vector.load %arg5[%c2_82, %c5_83, %c0_84] : memref<8x8x128xf32, #tpu.memory_space<vmem>>, vector<1x1x128xf32>
    %121 = vector.shape_cast %120 : vector<1x1x128xf32> to vector<1x128xf32>
    %122 = arith.mulf %121, %74 : vector<1x128xf32>
    %123 = arith.subf %119, %122 : vector<1x128xf32>
    %c3_85 = arith.constant 3 : index
    %c5_86 = arith.constant 5 : index
    %c0_87 = arith.constant 0 : index
    %124 = vector.load %arg5[%c3_85, %c5_86, %c0_87] : memref<8x8x128xf32, #tpu.memory_space<vmem>>, vector<1x1x128xf32>
    %125 = vector.shape_cast %124 : vector<1x1x128xf32> to vector<1x128xf32>
    %126 = arith.mulf %125, %90 : vector<1x128xf32>
    %127 = arith.subf %123, %126 : vector<1x128xf32>
    %c4_88 = arith.constant 4 : index
    %c5_89 = arith.constant 5 : index
    %c0_90 = arith.constant 0 : index
    %128 = vector.load %arg5[%c4_88, %c5_89, %c0_90] : memref<8x8x128xf32, #tpu.memory_space<vmem>>, vector<1x1x128xf32>
    %129 = vector.shape_cast %128 : vector<1x1x128xf32> to vector<1x128xf32>
    %130 = arith.mulf %129, %110 : vector<1x128xf32>
    %131 = arith.subf %127, %130 : vector<1x128xf32>
    %c5_91 = arith.constant 5 : index
    %c5_92 = arith.constant 5 : index
    %c0_93 = arith.constant 0 : index
    %132 = vector.load %arg5[%c5_91, %c5_92, %c0_93] : memref<8x8x128xf32, #tpu.memory_space<vmem>>, vector<1x1x128xf32>
    %133 = vector.shape_cast %132 : vector<1x1x128xf32> to vector<1x128xf32>
    %134 = arith.divf %131, %133 : vector<1x128xf32>
    %135 = vector.extract_strided_slice %10 {offsets = [6, 0], sizes = [1, 128], strides = [1, 1]} : vector<8x128xf32> to vector<1x128xf32>
    %c0_94 = arith.constant 0 : index
    %c6_95 = arith.constant 6 : index
    %c0_96 = arith.constant 0 : index
    %136 = vector.load %arg5[%c0_94, %c6_95, %c0_96] : memref<8x8x128xf32, #tpu.memory_space<vmem>>, vector<1x1x128xf32>
    %137 = vector.shape_cast %136 : vector<1x1x128xf32> to vector<1x128xf32>
    %138 = arith.mulf %137, %54 : vector<1x128xf32>
    %139 = arith.subf %135, %138 : vector<1x128xf32>
    %c1_97 = arith.constant 1 : index
    %c6_98 = arith.constant 6 : index
    %c0_99 = arith.constant 0 : index
    %140 = vector.load %arg5[%c1_97, %c6_98, %c0_99] : memref<8x8x128xf32, #tpu.memory_space<vmem>>, vector<1x1x128xf32>
    %141 = vector.shape_cast %140 : vector<1x1x128xf32> to vector<1x128xf32>
    %142 = arith.mulf %141, %62 : vector<1x128xf32>
    %143 = arith.subf %139, %142 : vector<1x128xf32>
    %c2_100 = arith.constant 2 : index
    %c6_101 = arith.constant 6 : index
    %c0_102 = arith.constant 0 : index
    %144 = vector.load %arg5[%c2_100, %c6_101, %c0_102] : memref<8x8x128xf32, #tpu.memory_space<vmem>>, vector<1x1x128xf32>
    %145 = vector.shape_cast %144 : vector<1x1x128xf32> to vector<1x128xf32>
    %146 = arith.mulf %145, %74 : vector<1x128xf32>
    %147 = arith.subf %143, %146 : vector<1x128xf32>
    %c3_103 = arith.constant 3 : index
    %c6_104 = arith.constant 6 : index
    %c0_105 = arith.constant 0 : index
    %148 = vector.load %arg5[%c3_103, %c6_104, %c0_105] : memref<8x8x128xf32, #tpu.memory_space<vmem>>, vector<1x1x128xf32>
    %149 = vector.shape_cast %148 : vector<1x1x128xf32> to vector<1x128xf32>
    %150 = arith.mulf %149, %90 : vector<1x128xf32>
    %151 = arith.subf %147, %150 : vector<1x128xf32>
    %c4_106 = arith.constant 4 : index
    %c6_107 = arith.constant 6 : index
    %c0_108 = arith.constant 0 : index
    %152 = vector.load %arg5[%c4_106, %c6_107, %c0_108] : memref<8x8x128xf32, #tpu.memory_space<vmem>>, vector<1x1x128xf32>
    %153 = vector.shape_cast %152 : vector<1x1x128xf32> to vector<1x128xf32>
    %154 = arith.mulf %153, %110 : vector<1x128xf32>
    %155 = arith.subf %151, %154 : vector<1x128xf32>
    %c5_109 = arith.constant 5 : index
    %c6_110 = arith.constant 6 : index
    %c0_111 = arith.constant 0 : index
    %156 = vector.load %arg5[%c5_109, %c6_110, %c0_111] : memref<8x8x128xf32, #tpu.memory_space<vmem>>, vector<1x1x128xf32>
    %157 = vector.shape_cast %156 : vector<1x1x128xf32> to vector<1x128xf32>
    %158 = arith.mulf %157, %134 : vector<1x128xf32>
    %159 = arith.subf %155, %158 : vector<1x128xf32>
    %c6_112 = arith.constant 6 : index
    %c6_113 = arith.constant 6 : index
    %c0_114 = arith.constant 0 : index
    %160 = vector.load %arg5[%c6_112, %c6_113, %c0_114] : memref<8x8x128xf32, #tpu.memory_space<vmem>>, vector<1x1x128xf32>
    %161 = vector.shape_cast %160 : vector<1x1x128xf32> to vector<1x128xf32>
    %162 = arith.divf %159, %161 : vector<1x128xf32>
    %163 = vector.extract_strided_slice %10 {offsets = [7, 0], sizes = [1, 128], strides = [1, 1]} : vector<8x128xf32> to vector<1x128xf32>
    %c0_115 = arith.constant 0 : index
    %c7_116 = arith.constant 7 : index
    %c0_117 = arith.constant 0 : index
    %164 = vector.load %arg5[%c0_115, %c7_116, %c0_117] : memref<8x8x128xf32, #tpu.memory_space<vmem>>, vector<1x1x128xf32>
    %165 = vector.shape_cast %164 : vector<1x1x128xf32> to vector<1x128xf32>
    %166 = arith.mulf %165, %54 : vector<1x128xf32>
    %167 = arith.subf %163, %166 : vector<1x128xf32>
    %c1_118 = arith.constant 1 : index
    %c7_119 = arith.constant 7 : index
    %c0_120 = arith.constant 0 : index
    %168 = vector.load %arg5[%c1_118, %c7_119, %c0_120] : memref<8x8x128xf32, #tpu.memory_space<vmem>>, vector<1x1x128xf32>
    %169 = vector.shape_cast %168 : vector<1x1x128xf32> to vector<1x128xf32>
    %170 = arith.mulf %169, %62 : vector<1x128xf32>
    %171 = arith.subf %167, %170 : vector<1x128xf32>
    %c2_121 = arith.constant 2 : index
    %c7_122 = arith.constant 7 : index
    %c0_123 = arith.constant 0 : index
    %172 = vector.load %arg5[%c2_121, %c7_122, %c0_123] : memref<8x8x128xf32, #tpu.memory_space<vmem>>, vector<1x1x128xf32>
    %173 = vector.shape_cast %172 : vector<1x1x128xf32> to vector<1x128xf32>
    %174 = arith.mulf %173, %74 : vector<1x128xf32>
    %175 = arith.subf %171, %174 : vector<1x128xf32>
    %c3_124 = arith.constant 3 : index
    %c7_125 = arith.constant 7 : index
    %c0_126 = arith.constant 0 : index
    %176 = vector.load %arg5[%c3_124, %c7_125, %c0_126] : memref<8x8x128xf32, #tpu.memory_space<vmem>>, vector<1x1x128xf32>
    %177 = vector.shape_cast %176 : vector<1x1x128xf32> to vector<1x128xf32>
    %178 = arith.mulf %177, %90 : vector<1x128xf32>
    %179 = arith.subf %175, %178 : vector<1x128xf32>
    %c4_127 = arith.constant 4 : index
    %c7_128 = arith.constant 7 : index
    %c0_129 = arith.constant 0 : index
    %180 = vector.load %arg5[%c4_127, %c7_128, %c0_129] : memref<8x8x128xf32, #tpu.memory_space<vmem>>, vector<1x1x128xf32>
    %181 = vector.shape_cast %180 : vector<1x1x128xf32> to vector<1x128xf32>
    %182 = arith.mulf %181, %110 : vector<1x128xf32>
    %183 = arith.subf %179, %182 : vector<1x128xf32>
    %c5_130 = arith.constant 5 : index
    %c7_131 = arith.constant 7 : index
    %c0_132 = arith.constant 0 : index
    %184 = vector.load %arg5[%c5_130, %c7_131, %c0_132] : memref<8x8x128xf32, #tpu.memory_space<vmem>>, vector<1x1x128xf32>
    %185 = vector.shape_cast %184 : vector<1x1x128xf32> to vector<1x128xf32>
    %186 = arith.mulf %185, %134 : vector<1x128xf32>
    %187 = arith.subf %183, %186 : vector<1x128xf32>
    %c6_133 = arith.constant 6 : index
    %c7_134 = arith.constant 7 : index
    %c0_135 = arith.constant 0 : index
    %188 = vector.load %arg5[%c6_133, %c7_134, %c0_135] : memref<8x8x128xf32, #tpu.memory_space<vmem>>, vector<1x1x128xf32>
    %189 = vector.shape_cast %188 : vector<1x1x128xf32> to vector<1x128xf32>
    %190 = arith.mulf %189, %162 : vector<1x128xf32>
    %191 = arith.subf %187, %190 : vector<1x128xf32>
    %c7_136 = arith.constant 7 : index
    %c7_137 = arith.constant 7 : index
    %c0_138 = arith.constant 0 : index
    %192 = vector.load %arg5[%c7_136, %c7_137, %c0_138] : memref<8x8x128xf32, #tpu.memory_space<vmem>>, vector<1x1x128xf32>
    %193 = vector.shape_cast %192 : vector<1x1x128xf32> to vector<1x128xf32>
    %194 = arith.divf %191, %193 : vector<1x128xf32>
    %cst_139 = arith.constant 0.000000e+00 : f32
    %195 = vector.broadcast %cst_139 : f32 to vector<32x128xf32>
    %c0_140 = arith.constant 0 : index
    %c0_141 = arith.constant 0 : index
    %c0_142 = arith.constant 0 : index
    %196 = vector.load %arg4[%c0_140, %c0_141, %c0_142] : memref<8x32x128xf32, #tpu.memory_space<vmem>>, vector<1x32x128xf32>
    %197 = vector.shape_cast %196 : vector<1x32x128xf32> to vector<32x128xf32>
    %198 = arith.subf %54, %15 : vector<1x128xf32>
    %199 = vector.broadcast %198 : vector<1x128xf32> to vector<32x128xf32>
    %200 = arith.mulf %197, %199 : vector<32x128xf32>
    %201 = arith.addf %195, %200 : vector<32x128xf32>
    %c1_143 = arith.constant 1 : index
    %c0_144 = arith.constant 0 : index
    %c0_145 = arith.constant 0 : index
    %202 = vector.load %arg4[%c1_143, %c0_144, %c0_145] : memref<8x32x128xf32, #tpu.memory_space<vmem>>, vector<1x32x128xf32>
    %203 = vector.shape_cast %202 : vector<1x32x128xf32> to vector<32x128xf32>
    %204 = arith.subf %62, %20 : vector<1x128xf32>
    %205 = vector.broadcast %204 : vector<1x128xf32> to vector<32x128xf32>
    %206 = arith.mulf %203, %205 : vector<32x128xf32>
    %207 = arith.addf %201, %206 : vector<32x128xf32>
    %c2_146 = arith.constant 2 : index
    %c0_147 = arith.constant 0 : index
    %c0_148 = arith.constant 0 : index
    %208 = vector.load %arg4[%c2_146, %c0_147, %c0_148] : memref<8x32x128xf32, #tpu.memory_space<vmem>>, vector<1x32x128xf32>
    %209 = vector.shape_cast %208 : vector<1x32x128xf32> to vector<32x128xf32>
    %210 = arith.subf %74, %25 : vector<1x128xf32>
    %211 = vector.broadcast %210 : vector<1x128xf32> to vector<32x128xf32>
    %212 = arith.mulf %209, %211 : vector<32x128xf32>
    %213 = arith.addf %207, %212 : vector<32x128xf32>
    %c3_149 = arith.constant 3 : index
    %c0_150 = arith.constant 0 : index
    %c0_151 = arith.constant 0 : index
    %214 = vector.load %arg4[%c3_149, %c0_150, %c0_151] : memref<8x32x128xf32, #tpu.memory_space<vmem>>, vector<1x32x128xf32>
    %215 = vector.shape_cast %214 : vector<1x32x128xf32> to vector<32x128xf32>
    %216 = arith.subf %90, %30 : vector<1x128xf32>
    %217 = vector.broadcast %216 : vector<1x128xf32> to vector<32x128xf32>
    %218 = arith.mulf %215, %217 : vector<32x128xf32>
    %219 = arith.addf %213, %218 : vector<32x128xf32>
    %c4_152 = arith.constant 4 : index
    %c0_153 = arith.constant 0 : index
    %c0_154 = arith.constant 0 : index
    %220 = vector.load %arg4[%c4_152, %c0_153, %c0_154] : memref<8x32x128xf32, #tpu.memory_space<vmem>>, vector<1x32x128xf32>
    %221 = vector.shape_cast %220 : vector<1x32x128xf32> to vector<32x128xf32>
    %222 = arith.subf %110, %35 : vector<1x128xf32>
    %223 = vector.broadcast %222 : vector<1x128xf32> to vector<32x128xf32>
    %224 = arith.mulf %221, %223 : vector<32x128xf32>
    %225 = arith.addf %219, %224 : vector<32x128xf32>
    %c5_155 = arith.constant 5 : index
    %c0_156 = arith.constant 0 : index
    %c0_157 = arith.constant 0 : index
    %226 = vector.load %arg4[%c5_155, %c0_156, %c0_157] : memref<8x32x128xf32, #tpu.memory_space<vmem>>, vector<1x32x128xf32>
    %227 = vector.shape_cast %226 : vector<1x32x128xf32> to vector<32x128xf32>
    %228 = arith.subf %134, %40 : vector<1x128xf32>
    %229 = vector.broadcast %228 : vector<1x128xf32> to vector<32x128xf32>
    %230 = arith.mulf %227, %229 : vector<32x128xf32>
    %231 = arith.addf %225, %230 : vector<32x128xf32>
    %c6_158 = arith.constant 6 : index
    %c0_159 = arith.constant 0 : index
    %c0_160 = arith.constant 0 : index
    %232 = vector.load %arg4[%c6_158, %c0_159, %c0_160] : memref<8x32x128xf32, #tpu.memory_space<vmem>>, vector<1x32x128xf32>
    %233 = vector.shape_cast %232 : vector<1x32x128xf32> to vector<32x128xf32>
    %234 = arith.subf %162, %45 : vector<1x128xf32>
    %235 = vector.broadcast %234 : vector<1x128xf32> to vector<32x128xf32>
    %236 = arith.mulf %233, %235 : vector<32x128xf32>
    %237 = arith.addf %231, %236 : vector<32x128xf32>
    %c7_161 = arith.constant 7 : index
    %c0_162 = arith.constant 0 : index
    %c0_163 = arith.constant 0 : index
    %238 = vector.load %arg4[%c7_161, %c0_162, %c0_163] : memref<8x32x128xf32, #tpu.memory_space<vmem>>, vector<1x32x128xf32>
    %239 = vector.shape_cast %238 : vector<1x32x128xf32> to vector<32x128xf32>
    %240 = arith.subf %194, %50 : vector<1x128xf32>
    %241 = vector.broadcast %240 : vector<1x128xf32> to vector<32x128xf32>
    %242 = arith.mulf %239, %241 : vector<32x128xf32>
    %243 = arith.addf %237, %242 : vector<32x128xf32>
    %244 = arith.addf %0, %243 : vector<32x128xf32>
    %c0_164 = arith.constant 0 : index
    %c0_165 = arith.constant 0 : index
    %245 = vector.load %arg6[%c0_164, %c0_165] : memref<32x128xf32, #tpu.memory_space<vmem>>, vector<32x128xf32>
    tpu.vector_store %arg6[%c0_164, %c0_165], %244 {strides = array<i32>} : memref<32x128xf32, #tpu.memory_space<vmem>>, vector<32x128xf32>,
    return
  }
  func.func @transform_0(%arg0: i32) -> (i32, i32) {
    %c0_i32 = arith.constant 0 : i32
    %c0_i32_0 = arith.constant 0 : i32
    %c0_i32_1 = arith.constant 0 : i32
    return %c0_i32, %c0_i32_0 : i32, i32
  }
  func.func @transform_1(%arg0: i32) -> (i32, i32) {
    %c0_i32 = arith.constant 0 : i32
    %c0_i32_0 = arith.constant 0 : i32
    return %c0_i32, %arg0 : i32, i32
  }
  func.func @transform_2(%arg0: i32) -> (i32, i32) {
    %c0_i32 = arith.constant 0 : i32
    %c0_i32_0 = arith.constant 0 : i32
    return %c0_i32, %arg0 : i32, i32
  }
  func.func @transform_3(%arg0: i32) -> (i32, i32, i32) {
    %c0_i32 = arith.constant 0 : i32
    %c0_i32_0 = arith.constant 0 : i32
    %c0_i32_1 = arith.constant 0 : i32
    return %c0_i32, %c0_i32_0, %arg0 : i32, i32, i32
  }
  func.func @transform_4(%arg0: i32) -> (i32, i32, i32) {
    %c0_i32 = arith.constant 0 : i32
    %c0_i32_0 = arith.constant 0 : i32
    %c0_i32_1 = arith.constant 0 : i32
    return %c0_i32, %c0_i32_0, %arg0 : i32, i32, i32
  }
  func.func @transform_5(%arg0: i32) -> (i32, i32) {
    %c0_i32 = arith.constant 0 : i32
    %c0_i32_0 = arith.constant 0 : i32
    return %c0_i32, %arg0 : i32, i32
  }
}

</mosaic_0001>

<llo_original>
// kernel: tpu_custom_call.1
$region0: #{tpu_custom_call.1}
  #allocation0 [shape = 'u32[]', space=smem, size = 0x4, offset = 0x4, fixed_abs, tag = 'smem constant byte address 0x4 - core index']
  #allocation1 [shape = 'u32[144,128]{1,0:T(1,128)}', space=vmem, size = 0x12000, scoped, tag = 'internal scratch']
  %s0 = inlined_call_operand.hbm [shape: f32[8,32], index: 0, kind: input, shape index: {}]
  %s1 = inlined_call_operand.hbm [shape: f32[32,256], index: 1, kind: input, shape index: {}]
  %s2 = inlined_call_operand.hbm [shape: f32[8,256], index: 2, kind: input, shape index: {}]
  %s3 = inlined_call_operand.hbm [shape: f32[8,32,256], index: 3, kind: input, shape index: {}]
  %s4 = inlined_call_operand.hbm [shape: f32[8,8,256], index: 4, kind: input, shape index: {}]
  %s5 = inlined_call_operand.hbm [shape: f32[32,256], index: 5, kind: output, shape index: {}]
  %s6 = sld [smem:[#allocation0]]
  $region73: #{tpu_custom_call.1} parent=0
    _
  %s8 = ssub.s32 1, %s6
  %s9 = scalar_select 0, %s8, %s6
  $region1: #{tpu_custom_call.1} parent=0
    #allocation2 [shape = 'u8[4096]{0}', space=vmem, size = 0x1000, scoped, tag = 'input window, operand 0, single buffered']
    #allocation3 [shape = 's32[2]{0}', space=sflag, size = 0x8, scoped, tag = 'scoped memory for tpu_custom_call.1']
    #allocation4 [shape = 's32[2]{0}', space=sflag, size = 0x8, scoped, tag = 'scoped memory for tpu_custom_call.1']
    #allocation5 [shape = 'u8[32768]{0}', space=vmem, size = 0x8000, scoped, tag = 'input window, operand 1']
    #allocation6 [shape = 's32[2]{0}', space=sflag, size = 0x8, scoped, tag = 'scoped memory for tpu_custom_call.1']
    #allocation7 [shape = 'u8[8192]{0}', space=vmem, size = 0x2000, scoped, tag = 'input window, operand 2']
    #allocation8 [shape = 'u8[262144]{0}', space=vmem, size = 0x40000, scoped, tag = 'input window, operand 3']
    #allocation9 [shape = 's32[2]{0}', space=sflag, size = 0x8, scoped, tag = 'scoped memory for tpu_custom_call.1']
    #allocation10 [shape = 'u8[65536]{0}', space=vmem, size = 0x10000, scoped, tag = 'input window, operand 4']
    #allocation11 [shape = 'u8[32768]{0}', space=vmem, size = 0x8000, scoped, tag = 'output window, operand 0']
    %10 = vsyncpa [#allocation3], 0
    %11 = vsyncpa [#allocation6], 0
    %s12 = scalar_lea.sflag [#allocation6], 1
    %13 = vsyncpa %s12, 0
    %14 = vsyncpa [#allocation9], 0
    %s15 = scalar_lea.sflag [#allocation9], 1
    %16 = vsyncpa %s15, 0
    %17 = vsyncpa [#allocation4], 0
    %s18 = scalar_lea.sflag [#allocation4], 1
    %19 = vsyncpa %s18, 0
    loop: start=0, step=1, limit=4
    $region2: #{tpu_custom_call.1} parent=1 // loop_pre_header
      _
    $region3: #{tpu_custom_call.1} parent=1 // loop_header
      %s21 = sphi 0, %s25
      %p22 = scmp.ge.s32.totalorder %s21, 4
      %s29 = sphi 0, %s29
      %s31 = sphi 0, %s29
      %s32 = sphi 0, %s31
      %s46 = sphi 0, %s32
      %s52 = sphi 0, %s54
      %s55 = sphi 0, %s52
      %s56 = sphi 0, %s55
      %s72 = sphi 0, %s56
      %s78 = sphi 0, %s80
      %s81 = sphi 0, %s78
      %s82 = sphi 0, %s81
      %s98 = sphi 0, %s82
      %s104 = sphi 0, %s106
      %s107 = sphi 0, %s104
      %s108 = sphi 0, %s107
      %s124 = sphi 0, %s108
      %s130 = sphi 0, %s132
      %s133 = sphi 0, %s130
      %s134 = sphi 0, %s133
      %s150 = sphi 0, %s134
      %s156 = sphi 0, %s158
      %s159 = sphi 0, %s156
      %s160 = sphi 0, %s159
      %s176 = sphi 0, %s160
    $region4: #{tpu_custom_call.1} parent=1 // loop_header_branch
      %24 = sbr.rel (%p22) target = $region8
    $region5: #{tpu_custom_call.1} parent=1 // loop_body
      %s26 = ssub.s32 %s21, 1
      %s27 = ssub.s32 %s21, 2
      %s28 = sadd.s32 %s21, 1
      %s30 = sadd.s32 %s29, 1
      %p33 = scmp.eq.s32.totalorder %s21, 1
      %p34 = scmp.ne.s32.totalorder %s29, %s31
      %p35 = scmp.eq.s32.totalorder %s21, 0
      %p36 = por %p34, %p35
      %p37 = scmp.ne.s32.totalorder %s29, %s31
      %p38 = scmp.eq.s32.totalorder %s26, 1
      %p39 = por %p37, %p38
      %p40 = scmp.ne.s32.totalorder %s31, %s32
      %p41 = scmp.eq.s32.totalorder %s26, 0
      %p42 = por %p40, %p41
      %p43 = scmp.ne.s32.totalorder %s31, %s32
      %p44 = scmp.eq.s32.totalorder %s27, 1
      %p45 = por %p43, %p44
      %p47 = scmp.ne.s32.totalorder %s32, %s46
      %p48 = scmp.eq.s32.totalorder %s27, 0
      %p49 = por %p47, %p48
      %s50 = ssub.s32 %s21, %s28
      %p51 = scmp.eq.s32.totalorder %s50, 0
      %s53 = sadd.s32 %s52, 1
      %s54 = scalar_select %p51, %s52, %s53
      %p57 = pneg %p51
      %p58 = scmp.eq.s32.totalorder %s21, 1
      %p59 = por %p57, %p58
      %p60 = scmp.ne.s32.totalorder %s52, %s55
      %p61 = scmp.eq.s32.totalorder %s21, 0
      %p62 = por %p60, %p61
      %p63 = scmp.ne.s32.totalorder %s52, %s55
      %p64 = scmp.eq.s32.totalorder %s26, 1
      %p65 = por %p63, %p64
      %p66 = scmp.ne.s32.totalorder %s55, %s56
      %p67 = scmp.eq.s32.totalorder %s26, 0
      %p68 = por %p66, %p67
      %p69 = scmp.ne.s32.totalorder %s55, %s56
      %p70 = scmp.eq.s32.totalorder %s27, 1
      %p71 = por %p69, %p70
      %p73 = scmp.ne.s32.totalorder %s56, %s72
      %p74 = scmp.eq.s32.totalorder %s27, 0
      %p75 = por %p73, %p74
      %s76 = ssub.s32 %s21, %s28
      %p77 = scmp.eq.s32.totalorder %s76, 0
      %s79 = sadd.s32 %s78, 1
      %s80 = scalar_select %p77, %s78, %s79
      %p83 = pneg %p77
      %p84 = scmp.eq.s32.totalorder %s21, 1
      %p85 = por %p83, %p84
      %p86 = scmp.ne.s32.totalorder %s78, %s81
      %p87 = scmp.eq.s32.totalorder %s21, 0
      %p88 = por %p86, %p87
      %p89 = scmp.ne.s32.totalorder %s78, %s81
      %p90 = scmp.eq.s32.totalorder %s26, 1
      %p91 = por %p89, %p90
      %p92 = scmp.ne.s32.totalorder %s81, %s82
      %p93 = scmp.eq.s32.totalorder %s26, 0
      %p94 = por %p92, %p93
      %p95 = scmp.ne.s32.totalorder %s81, %s82
      %p96 = scmp.eq.s32.totalorder %s27, 1
      %p97 = por %p95, %p96
      %p99 = scmp.ne.s32.totalorder %s82, %s98
      %p100 = scmp.eq.s32.totalorder %s27, 0
      %p101 = por %p99, %p100
      %s102 = ssub.s32 %s21, %s28
      %p103 = scmp.eq.s32.totalorder %s102, 0
      %s105 = sadd.s32 %s104, 1
      %s106 = scalar_select %p103, %s104, %s105
      %p109 = pneg %p103
      %p110 = scmp.eq.s32.totalorder %s21, 1
      %p111 = por %p109, %p110
      %p112 = scmp.ne.s32.totalorder %s104, %s107
      %p113 = scmp.eq.s32.totalorder %s21, 0
      %p114 = por %p112, %p113
      %p115 = scmp.ne.s32.totalorder %s104, %s107
      %p116 = scmp.eq.s32.totalorder %s26, 1
      %p117 = por %p115, %p116
      %p118 = scmp.ne.s32.totalorder %s107, %s108
      %p119 = scmp.eq.s32.totalorder %s26, 0
      %p120 = por %p118, %p119
      %p121 = scmp.ne.s32.totalorder %s107, %s108
      %p122 = scmp.eq.s32.totalorder %s27, 1
      %p123 = por %p121, %p122
      %p125 = scmp.ne.s32.totalorder %s108, %s124
      %p126 = scmp.eq.s32.totalorder %s27, 0
      %p127 = por %p125, %p126
      %s128 = ssub.s32 %s21, %s28
      %p129 = scmp.eq.s32.totalorder %s128, 0
      %s131 = sadd.s32 %s130, 1
      %s132 = scalar_select %p129, %s130, %s131
      %p135 = pneg %p129
      %p136 = scmp.eq.s32.totalorder %s21, 1
      %p137 = por %p135, %p136
      %p138 = scmp.ne.s32.totalorder %s130, %s133
      %p139 = scmp.eq.s32.totalorder %s21, 0
      %p140 = por %p138, %p139
      %p141 = scmp.ne.s32.totalorder %s130, %s133
      %p142 = scmp.eq.s32.totalorder %s26, 1
      %p143 = por %p141, %p142
      %p144 = scmp.ne.s32.totalorder %s133, %s134
      %p145 = scmp.eq.s32.totalorder %s26, 0
      %p146 = por %p144, %p145
      %p147 = scmp.ne.s32.totalorder %s133, %s134
      %p148 = scmp.eq.s32.totalorder %s27, 1
      %p149 = por %p147, %p148
      %p151 = scmp.ne.s32.totalorder %s134, %s150
      %p152 = scmp.eq.s32.totalorder %s27, 0
      %p153 = por %p151, %p152
      %s154 = ssub.s32 %s21, %s28
      %p155 = scmp.eq.s32.totalorder %s154, 0
      %s157 = sadd.s32 %s156, 1
      %s158 = scalar_select %p155, %s156, %s157
      %p161 = pneg %p155
      %p162 = scmp.eq.s32.totalorder %s21, 1
      %p163 = por %p161, %p162
      %p164 = scmp.ne.s32.totalorder %s156, %s159
      %p165 = scmp.eq.s32.totalorder %s21, 0
      %p166 = por %p164, %p165
      %p167 = scmp.ne.s32.totalorder %s156, %s159
      %p168 = scmp.eq.s32.totalorder %s26, 1
      %p169 = por %p167, %p168
      %p170 = scmp.ne.s32.totalorder %s159, %s160
      %p171 = scmp.eq.s32.totalorder %s26, 0
      %p172 = por %p170, %p171
      %p173 = scmp.ne.s32.totalorder %s159, %s160
      %p174 = scmp.eq.s32.totalorder %s27, 1
      %p175 = por %p173, %p174
      %p177 = scmp.ne.s32.totalorder %s160, %s176
      %p178 = scmp.eq.s32.totalorder %s27, 0
      %p179 = por %p177, %p178
      %p180 = scmp.le.s32.totalorder 1, %s21
      %p181 = scmp.lt.s32.totalorder %s21, 3
      %p182 = pnand %p180, %p181
      %p183 = pneg %p182
      // Predicated region
      $region9: #{tpu_custom_call.1} parent=5 // pred_check
        _
      $region10: #{tpu_custom_call.1} parent=5 // pred_check_branch
        %185 = sbr.rel (%p182) target = $region12
      $region11: #{tpu_custom_call.1} parent=5 // pred_region
        %s186 = ssub.s32 %s21, 1
        // Predicated region
        $region13: #{tpu_custom_call.1} parent=11 // pred_check
          %p187 = pneg %p42
        $region14: #{tpu_custom_call.1} parent=11 // pred_check_branch
          %189 = sbr.rel (%p187) target = $region16
        $region15: #{tpu_custom_call.1} parent=11 // pred_region
          %s191 = ssub.s32 128, 128
          %192 = vsyncadd [#allocation3], %s191
          %s194 = sshll.u32 [#allocation2], 4
          %s195 = int_to_ptr.vmem [resolvable:$true] %s194
          %197 = dma.hbm_to_vmem [thread:$0]  %s0, 128, %s195, [#allocation3]
        $region16: #{tpu_custom_call.1} parent=11 // pred_fallthru
          _
      $region12: #{tpu_custom_call.1} parent=5 // pred_fallthru
        _
      %p198 = scmp.lt.s32.totalorder %s21, 2
      // Predicated region
      $region17: #{tpu_custom_call.1} parent=5 // pred_check
        %p199 = pneg %p198
      $region18: #{tpu_custom_call.1} parent=5 // pred_check_branch
        %201 = sbr.rel (%p199) target = $region20
      $region19: #{tpu_custom_call.1} parent=5 // pred_region
        // Predicated region
        $region21: #{tpu_custom_call.1} parent=19 // pred_check
          %p202 = pneg %p62
        $region22: #{tpu_custom_call.1} parent=19 // pred_check_branch
          %204 = sbr.rel (%p202) target = $region24
        $region23: #{tpu_custom_call.1} parent=19 // pred_region
          %s205 = sand.u32 %s21, 1
          %s206 = scalar_lea.sflag [#allocation6], %s205
          %s207 = sand.u32 %s52, 1
          %s208 = smul.addr %s207, 32
          %s209 = scalar_lea.vmem [#allocation5], %s208
          %s211 = ssub.s32 512, 512
          %212 = vsyncadd %s206, %s211
          %s213 = smul.addr %s21, 128
          %s214 = scalar_lea.hbm %s1, %s213
          %s215 = sshll.u32 %s209, 4
          %s216 = int_to_ptr.vmem [resolvable:$true] %s215
          %221 = dma.hbm_to_vmem [thread:$0]  %s214, 512, %s216, %s206, 256, 128, 8
        $region24: #{tpu_custom_call.1} parent=19 // pred_fallthru
          _
        // Predicated region
        $region25: #{tpu_custom_call.1} parent=19 // pred_check
          %p222 = pneg %p88
        $region26: #{tpu_custom_call.1} parent=19 // pred_check_branch
          %224 = sbr.rel (%p222) target = $region28
        $region27: #{tpu_custom_call.1} parent=19 // pred_region
          %s225 = sand.u32 %s21, 1
          %s226 = scalar_lea.sflag [#allocation6], %s225
          %s227 = sand.u32 %s78, 1
          %s228 = smul.addr %s227, 8
          %s229 = scalar_lea.vmem [#allocation7], %s228
          %s231 = ssub.s32 128, 128
          %232 = vsyncadd %s226, %s231
          %s233 = smul.addr %s21, 128
          %s234 = scalar_lea.hbm %s2, %s233
          %s236 = sshll.u32 %s229, 4
          %s237 = int_to_ptr.vmem [resolvable:$true] %s236
          %239 = dma.hbm_to_vmem [thread:$0]  %s234, 128, %s237, %s226
        $region28: #{tpu_custom_call.1} parent=19 // pred_fallthru
          _
        // Predicated region
        $region29: #{tpu_custom_call.1} parent=19 // pred_check
          %p240 = pneg %p114
        $region30: #{tpu_custom_call.1} parent=19 // pred_check_branch
          %242 = sbr.rel (%p240) target = $region32
        $region31: #{tpu_custom_call.1} parent=19 // pred_region
          %s243 = sand.u32 %s21, 1
          %s244 = scalar_lea.sflag [#allocation9], %s243
          %s245 = sand.u32 %s104, 1
          %s246 = smul.addr %s245, 256
          %s247 = scalar_lea.vmem [#allocation8], %s246
          %s249 = ssub.s32 4096, 4096
          %250 = vsyncadd %s244, %s249
          %s251 = smul.addr %s21, 128
          %s252 = scalar_lea.hbm %s3, %s251
          %s253 = sshll.u32 %s247, 4
          %s254 = int_to_ptr.vmem [resolvable:$true] %s253
          %259 = dma.hbm_to_vmem [thread:$0]  %s252, 4096, %s254, %s244, 256, 128, 8
        $region32: #{tpu_custom_call.1} parent=19 // pred_fallthru
          _
        // Predicated region
        $region33: #{tpu_custom_call.1} parent=19 // pred_check
          %p260 = pneg %p140
        $region34: #{tpu_custom_call.1} parent=19 // pred_check_branch
          %262 = sbr.rel (%p260) target = $region36
        $region35: #{tpu_custom_call.1} parent=19 // pred_region
          %s263 = sand.u32 %s21, 1
          %s264 = scalar_lea.sflag [#allocation9], %s263
          %s265 = sand.u32 %s130, 1
          %s266 = smul.addr %s265, 64
          %s267 = scalar_lea.vmem [#allocation10], %s266
          %s269 = ssub.s32 1024, 1024
          %270 = vsyncadd %s264, %s269
          %s271 = smul.addr %s21, 128
          %s272 = scalar_lea.hbm %s4, %s271
          %s273 = sshll.u32 %s267, 4
          %s274 = int_to_ptr.vmem [resolvable:$true] %s273
          %279 = dma.hbm_to_vmem [thread:$0]  %s272, 1024, %s274, %s264, 256, 128, 8
        $region36: #{tpu_custom_call.1} parent=19 // pred_fallthru
          _
      $region20: #{tpu_custom_call.1} parent=5 // pred_fallthru
        _
      %p280 = scmp.le.s32.totalorder 1, %s21
      %p281 = scmp.lt.s32.totalorder %s21, 3
      %p282 = pnand %p280, %p281
      %p283 = pneg %p282
      // Predicated region
      $region37: #{tpu_custom_call.1} parent=5 // pred_check
        _
      $region38: #{tpu_custom_call.1} parent=5 // pred_check_branch
        %285 = sbr.rel (%p282) target = $region40
      $region39: #{tpu_custom_call.1} parent=5 // pred_region
        %s286 = ssub.s32 %s21, 1
        // Predicated region
        $region41: #{tpu_custom_call.1} parent=39 // pred_check
          %p287 = pneg %p42
        $region42: #{tpu_custom_call.1} parent=39 // pred_check_branch
          %289 = sbr.rel (%p287) target = $region44
        $region43: #{tpu_custom_call.1} parent=39 // pred_region
          %290 = dma.done [#allocation3], 128
        $region44: #{tpu_custom_call.1} parent=39 // pred_fallthru
          _
        %s291 = sand.u32 %s26, 1
        %s292 = scalar_lea.sflag [#allocation6], %s291
        %s293 = sand.u32 %s55, 1
        %s294 = smul.addr %s293, 32
        %s295 = scalar_lea.vmem [#allocation5], %s294
        // Predicated region
        $region45: #{tpu_custom_call.1} parent=39 // pred_check
          %p296 = pneg %p68
        $region46: #{tpu_custom_call.1} parent=39 // pred_check_branch
          %298 = sbr.rel (%p296) target = $region48
        $region47: #{tpu_custom_call.1} parent=39 // pred_region
          %299 = dma.done %s292, 512
        $region48: #{tpu_custom_call.1} parent=39 // pred_fallthru
          _
        %s300 = sand.u32 %s26, 1
        %s301 = scalar_lea.sflag [#allocation6], %s300
        %s302 = sand.u32 %s81, 1
        %s303 = smul.addr %s302, 8
        %s304 = scalar_lea.vmem [#allocation7], %s303
        // Predicated region
        $region49: #{tpu_custom_call.1} parent=39 // pred_check
          %p305 = pneg %p94
        $region50: #{tpu_custom_call.1} parent=39 // pred_check_branch
          %307 = sbr.rel (%p305) target = $region52
        $region51: #{tpu_custom_call.1} parent=39 // pred_region
          %308 = dma.done %s301, 128
        $region52: #{tpu_custom_call.1} parent=39 // pred_fallthru
          _
        %s309 = sand.u32 %s26, 1
        %s310 = scalar_lea.sflag [#allocation9], %s309
        %s311 = sand.u32 %s107, 1
        %s312 = smul.addr %s311, 256
        %s313 = scalar_lea.vmem [#allocation8], %s312
        // Predicated region
        $region53: #{tpu_custom_call.1} parent=39 // pred_check
          %p314 = pneg %p120
        $region54: #{tpu_custom_call.1} parent=39 // pred_check_branch
          %316 = sbr.rel (%p314) target = $region56
        $region55: #{tpu_custom_call.1} parent=39 // pred_region
          %317 = dma.done %s310, 4096
        $region56: #{tpu_custom_call.1} parent=39 // pred_fallthru
          _
        %s318 = sand.u32 %s26, 1
        %s319 = scalar_lea.sflag [#allocation9], %s318
        %s320 = sand.u32 %s133, 1
        %s321 = smul.addr %s320, 64
        %s322 = scalar_lea.vmem [#allocation10], %s321
        // Predicated region
        $region57: #{tpu_custom_call.1} parent=39 // pred_check
          %p323 = pneg %p146
        $region58: #{tpu_custom_call.1} parent=39 // pred_check_branch
          %325 = sbr.rel (%p323) target = $region60
        $region59: #{tpu_custom_call.1} parent=39 // pred_region
          %326 = dma.done %s319, 1024
        $region60: #{tpu_custom_call.1} parent=39 // pred_fallthru
          _
        %p327 = pneg %p42
        %p328 = pneg %p39
        %s329 = sand.u32 %s26, 1
        %s330 = scalar_lea.sflag [#allocation6], %s329
        %s331 = sand.u32 %s55, 1
        %s332 = smul.addr %s331, 32
        %s333 = scalar_lea.vmem [#allocation5], %s332
        %p334 = pneg %p68
        %p335 = pneg %p65
        %s336 = sand.u32 %s26, 1
        %s337 = scalar_lea.sflag [#allocation6], %s336
        %s338 = sand.u32 %s81, 1
        %s339 = smul.addr %s338, 8
        %s340 = scalar_lea.vmem [#allocation7], %s339
        %p341 = pneg %p94
        %p342 = pneg %p91
        %s343 = sand.u32 %s26, 1
        %s344 = scalar_lea.sflag [#allocation9], %s343
        %s345 = sand.u32 %s107, 1
        %s346 = smul.addr %s345, 256
        %s347 = scalar_lea.vmem [#allocation8], %s346
        %p348 = pneg %p120
        %p349 = pneg %p117
        %s350 = sand.u32 %s26, 1
        %s351 = scalar_lea.sflag [#allocation9], %s350
        %s352 = sand.u32 %s133, 1
        %s353 = smul.addr %s352, 64
        %s354 = scalar_lea.vmem [#allocation10], %s353
        %p355 = pneg %p146
        %p356 = pneg %p143
        %p357 = pneg %p172
        %p358 = pneg %p169
        %s359 = sand.u32 %s159, 1
        %s360 = scalar_lea.sflag [#allocation4], %s359
        %s361 = sand.u32 %s159, 1
        %s362 = smul.addr %s361, 32
        %s363 = scalar_lea.vmem [#allocation11], %s362
        %v364 = vld [vmem:[%s295] sm:$0xff]
        %v365 = vld [vmem:[%s295 + $0x8] sm:$0xff]
        %v366 = vld [vmem:[%s295 + $0x10] sm:$0xff]
        %v367 = vld [vmem:[%s295 + $0x18] sm:$0xff]
        %v368 = vld [vmem:[%s304] sm:$0xff]
        %v369 = vld [vmem:[#allocation2] sm:$0xff]
        %v370 = vtanh.pop %v364
        %v371 = vtanh.pop %v365
        %v372 = vtanh.pop %v366
        %v373 = vtanh.pop %v367
        %v374 = vmul.f32 %v370, %v370
        %v375 = vmul.f32 %v371, %v371
        %v376 = vmul.f32 %v372, %v372
        %v377 = vmul.f32 %v373, %v373
        %v378 = vsub.f32 1.0, %v374
        %v379 = vsub.f32 1.0, %v375
        %v380 = vsub.f32 1.0, %v376
        %v381 = vsub.f32 1.0, %v377
        %v382 = vmul.f32 %v378, %v364
        %v383 = vmul.f32 %v379, %v365
        %v384 = vmul.f32 %v380, %v366
        %v385 = vmul.f32 %v381, %v367
        %v386 = vsub.f32 %v382, %v370
        %v387 = vsub.f32 %v383, %v371
        %v388 = vsub.f32 %v384, %v372
        %v389 = vsub.f32 %v385, %v373
        %vm390 = vcmask 261120
        %v392 = vsel %vm390, %v369, 0
        %394 = vmatprep.subr.mxu0 0.0
        %395 = vmatpush1.msra.mxu0 %v386
        %396 = vmatprep.subr.mxu0 0.0
        %397 = vmatpush1.msra.mxu0 %v387
        %398 = vmatprep.subr.mxu0 0.0
        %399 = vmatpush1.msra.mxu0 %v388
        %400 = vmatprep.subr.mxu0 0.0
        %401 = vmatpush1.msra.mxu0 %v389
        %402 = vmatprep.subr.mxu0 0.0
        %403 = vmatpush1.msra.mxu0 0.0
        %404 = vmatprep.subr.mxu0 0.0
        %405 = vmatpush1.msra.mxu0 0.0
        %406 = vmatprep.subr.mxu0 0.0
        %407 = vmatpush1.msra.mxu0 0.0
        %408 = vmatprep.subr.mxu0 0.0
        %409 = vmatpush1.msra.mxu0 0.0
        %410 = vmatprep.subr.mxu0 0.0
        %411 = vmatpush1.msra.mxu0 0.0
        %412 = vmatprep.subr.mxu0 0.0
        %413 = vmatpush1.msra.mxu0 0.0
        %414 = vmatprep.subr.mxu0 0.0
        %415 = vmatpush1.msra.mxu0 0.0
        %416 = vmatprep.subr.mxu0 0.0
        %417 = vmatpush1.msra.mxu0 0.0
        %418 = vmatprep.subr.mxu0 0.0
        %419 = vmatpush1.msra.mxu0 0.0
        %420 = vmatprep.subr.mxu0 0.0
        %421 = vmatpush1.msra.mxu0 0.0
        %422 = vmatprep.subr.mxu0 0.0
        %423 = vmatpush1.msra.mxu0 0.0
        %424 = vmatprep.subr.mxu0 0.0
        %425 = vmatpush1.msra.mxu0 0.0
        %426 = vmatprep.subr.mxu0 0.0
        %427 = vmatpush1.msra.mxu0 0.0
        %428 = vmatprep.subr.mxu0 0.0
        %429 = vmatpush1.msra.mxu0 0.0
        %430 = vmatprep.subr.mxu0 0.0
        %431 = vmatpush1.msra.mxu0 0.0
        %432 = vmatprep.subr.mxu0 0.0
        %433 = vmatpush1.msra.mxu0 0.0
        %434 = vmatprep.subr.mxu0 0.0
        %435 = vmatpush1.msra.mxu0 0.0
        %436 = vmatprep.subr.mxu0 0.0
        %437 = vmatpush1.msra.mxu0 0.0
        %438 = vmatprep.subr.mxu0 0.0
        %439 = vmatpush1.msra.mxu0 0.0
        %440 = vmatprep.subr.mxu0 0.0
        %441 = vmatpush1.msra.mxu0 0.0
        %442 = vmatprep.subr.mxu0 0.0
        %443 = vmatpush1.msra.mxu0 0.0
        %444 = vmatprep.subr.mxu0 0.0
        %445 = vmatpush1.msra.mxu0 0.0
        %446 = vmatprep.subr.mxu0 0.0
        %447 = vmatpush1.msra.mxu0 0.0
        %448 = vmatprep.subr.mxu0 0.0
        %449 = vmatpush1.msra.mxu0 0.0
        %450 = vmatprep.subr.mxu0 0.0
        %451 = vmatpush1.msra.mxu0 0.0
        %452 = vmatprep.subr.mxu0 0.0
        %453 = vmatpush1.msra.mxu0 0.0
        %454 = vmatprep.subr.mxu0 0.0
        %455 = vmatpush1.msra.mxu0 0.0
        %456 = vmatprep.subr.mxu0 0.0
        %457 = vmatpush1.msra.mxu0 0.0
        %458 = vmatprep.mubr.f32.mxu0 0.0
        %459 = vmatmul.mubr.f32.gmra.mrb[0].mxu0 %v392
        %v460 = vpop.f32.mrb[0].mxu0
        %v461 = vadd.f32 0.0, %v460
        %v462 = vpop.f32.mrb[0].mxu0
        %463 = vdwg.mxu0
        %v464 = vsub.f32 %v461, %v368
        %v465 = vld [vmem:[%s313] sm:$0xff]
        %v466 = vld [vmem:[%s313 + $0x8] sm:$0xff]
        %v467 = vld [vmem:[%s313 + $0x10] sm:$0xff]
        %v468 = vld [vmem:[%s313 + $0x18] sm:$0xff]
        %v469 = vmul.f32 %v465, %v364
        %v470 = vmul.f32 %v466, %v365
        %v471 = vmul.f32 %v467, %v366
        %v472 = vmul.f32 %v468, %v367
        %v473 = vadd.f32 %v469, %v470
        %v474 = vadd.f32 %v473, %v471
        %v475 = vadd.f32 %v474, %v472
        %v476 = vrot.slane %v475, 4
        %v477 = vadd.f32 %v475, %v476
        %v478 = vrot.slane %v477, 2
        %v479 = vadd.f32 %v477, %v478
        %v480 = vrot.slane %v479, 1
        %v481 = vadd.f32 %v479, %v480
        %s482 = scalar_lea.vmem %s313, 32 [#allocation8]
        %v483 = vld [vmem:[%s482] sm:$0xff]
        %v484 = vld [vmem:[%s482 + $0x8] sm:$0xff]
        %v485 = vld [vmem:[%s482 + $0x10] sm:$0xff]
        %v486 = vld [vmem:[%s482 + $0x18] sm:$0xff]
        %v487 = vmul.f32 %v483, %v364
        %v488 = vmul.f32 %v484, %v365
        %v489 = vmul.f32 %v485, %v366
        %v490 = vmul.f32 %v486, %v367
        %v491 = vadd.f32 %v487, %v488
        %v492 = vadd.f32 %v491, %v489
        %v493 = vadd.f32 %v492, %v490
        %v494 = vrot.slane %v493, 4
        %v495 = vadd.f32 %v493, %v494
        %v496 = vrot.slane %v495, 2
        %v497 = vadd.f32 %v495, %v496
        %v498 = vrot.slane %v497, 1
        %v499 = vadd.f32 %v497, %v498
        %s500 = scalar_lea.vmem %s313, 64 [#allocation8]
        %v501 = vld [vmem:[%s500] sm:$0xff]
        %v502 = vld [vmem:[%s500 + $0x8] sm:$0xff]
        %v503 = vld [vmem:[%s500 + $0x10] sm:$0xff]
        %v504 = vld [vmem:[%s500 + $0x18] sm:$0xff]
        %v505 = vmul.f32 %v501, %v364
        %v506 = vmul.f32 %v502, %v365
        %v507 = vmul.f32 %v503, %v366
        %v508 = vmul.f32 %v504, %v367
        %v509 = vadd.f32 %v505, %v506
        %v510 = vadd.f32 %v509, %v507
        %v511 = vadd.f32 %v510, %v508
        %v512 = vrot.slane %v511, 4
        %v513 = vadd.f32 %v511, %v512
        %v514 = vrot.slane %v513, 2
        %v515 = vadd.f32 %v513, %v514
        %v516 = vrot.slane %v515, 1
        %v517 = vadd.f32 %v515, %v516
        %s518 = scalar_lea.vmem %s313, 96 [#allocation8]
        %v519 = vld [vmem:[%s518] sm:$0xff]
        %v520 = vld [vmem:[%s518 + $0x8] sm:$0xff]
        %v521 = vld [vmem:[%s518 + $0x10] sm:$0xff]
        %v522 = vld [vmem:[%s518 + $0x18] sm:$0xff]
        %v523 = vmul.f32 %v519, %v364
        %v524 = vmul.f32 %v520, %v365
        %v525 = vmul.f32 %v521, %v366
        %v526 = vmul.f32 %v522, %v367
        %v527 = vadd.f32 %v523, %v524
        %v528 = vadd.f32 %v527, %v525
        %v529 = vadd.f32 %v528, %v526
        %v530 = vrot.slane %v529, 4
        %v531 = vadd.f32 %v529, %v530
        %v532 = vrot.slane %v531, 2
        %v533 = vadd.f32 %v531, %v532
        %v534 = vrot.slane %v533, 1
        %v535 = vadd.f32 %v533, %v534
        %s536 = scalar_lea.vmem %s313, 128 [#allocation8]
        %v537 = vld [vmem:[%s536] sm:$0xff]
        %v538 = vld [vmem:[%s536 + $0x8] sm:$0xff]
        %v539 = vld [vmem:[%s536 + $0x10] sm:$0xff]
        %v540 = vld [vmem:[%s536 + $0x18] sm:$0xff]
        %v541 = vmul.f32 %v537, %v364
        %v542 = vmul.f32 %v538, %v365
        %v543 = vmul.f32 %v539, %v366
        %v544 = vmul.f32 %v540, %v367
        %v545 = vadd.f32 %v541, %v542
        %v546 = vadd.f32 %v545, %v543
        %v547 = vadd.f32 %v546, %v544
        %v548 = vrot.slane %v547, 4
        %v549 = vadd.f32 %v547, %v548
        %v550 = vrot.slane %v549, 2
        %v551 = vadd.f32 %v549, %v550
        %v552 = vrot.slane %v551, 1
        %v553 = vadd.f32 %v551, %v552
        %s554 = scalar_lea.vmem %s313, 160 [#allocation8]
        %v555 = vld [vmem:[%s554] sm:$0xff]
        %v556 = vld [vmem:[%s554 + $0x8] sm:$0xff]
        %v557 = vld [vmem:[%s554 + $0x10] sm:$0xff]
        %v558 = vld [vmem:[%s554 + $0x18] sm:$0xff]
        %v559 = vmul.f32 %v555, %v364
        %v560 = vmul.f32 %v556, %v365
        %v561 = vmul.f32 %v557, %v366
        %v562 = vmul.f32 %v558, %v367
        %v563 = vadd.f32 %v559, %v560
        %v564 = vadd.f32 %v563, %v561
        %v565 = vadd.f32 %v564, %v562
        %v566 = vrot.slane %v565, 4
        %v567 = vadd.f32 %v565, %v566
        %v568 = vrot.slane %v567, 2
        %v569 = vadd.f32 %v567, %v568
        %v570 = vrot.slane %v569, 1
        %v571 = vadd.f32 %v569, %v570
        %s572 = scalar_lea.vmem %s313, 192 [#allocation8]
        %v573 = vld [vmem:[%s572] sm:$0xff]
        %v574 = vld [vmem:[%s572 + $0x8] sm:$0xff]
        %v575 = vld [vmem:[%s572 + $0x10] sm:$0xff]
        %v576 = vld [vmem:[%s572 + $0x18] sm:$0xff]
        %v577 = vmul.f32 %v573, %v364
        %v578 = vmul.f32 %v574, %v365
        %v579 = vmul.f32 %v575, %v366
        %v580 = vmul.f32 %v576, %v367
        %v581 = vadd.f32 %v577, %v578
        %v582 = vadd.f32 %v581, %v579
        %v583 = vadd.f32 %v582, %v580
        %v584 = vrot.slane %v583, 4
        %v585 = vadd.f32 %v583, %v584
        %v586 = vrot.slane %v585, 2
        %v587 = vadd.f32 %v585, %v586
        %v588 = vrot.slane %v587, 1
        %v589 = vadd.f32 %v587, %v588
        %s590 = scalar_lea.vmem %s313, 224 [#allocation8]
        %v591 = vld [vmem:[%s590] sm:$0xff]
        %v592 = vld [vmem:[%s590 + $0x8] sm:$0xff]
        %v593 = vld [vmem:[%s590 + $0x10] sm:$0xff]
        %v594 = vld [vmem:[%s590 + $0x18] sm:$0xff]
        %v595 = vmul.f32 %v591, %v364
        %v596 = vmul.f32 %v592, %v365
        %v597 = vmul.f32 %v593, %v366
        %v598 = vmul.f32 %v594, %v367
        %v599 = vadd.f32 %v595, %v596
        %v600 = vadd.f32 %v599, %v597
        %v601 = vadd.f32 %v600, %v598
        %v602 = vrot.slane %v601, 4
        %v603 = vadd.f32 %v601, %v602
        %v604 = vrot.slane %v603, 2
        %v605 = vadd.f32 %v603, %v604
        %v606 = vrot.slane %v605, 1
        %v607 = vadd.f32 %v605, %v606
        %v608 = vld [vmem:[%s322] sm:$0x1]
        %v609 = vrcp.pop %v608
        %v610 = vmul.f32 %v464, %v609
        %v611 = vld [vmem:[%s322 + $0x1] sm:$0x1]
        %v612 = vmul.f32 %v611, %v610
        %v614 = vrot.slane %v612, 7
        %v616 = vsub.f32 %v464, %v614
        %s617 = scalar_lea.vmem %s322, 8 [#allocation10]
        %v618 = vld [vmem:[%s617 + $0x1] sm:$0x1]
        %v620 = vrot.slane %v618, 7
        %v622 = vrcp.pop %v620
        %v623 = vmul.f32 %v616, %v622
        %v624 = vld [vmem:[%s322 + $0x2] sm:$0x1]
        %v625 = vmul.f32 %v624, %v610
        %v627 = vrot.slane %v625, 6
        %v629 = vsub.f32 %v464, %v627
        %v630 = vld [vmem:[%s617 + $0x2] sm:$0x1]
        %v632 = vrot.slane %v623, 1
        %v634 = vmul.f32 %v630, %v632
        %v636 = vrot.slane %v634, 6
        %v638 = vsub.f32 %v629, %v636
        %s639 = scalar_lea.vmem %s322, 16 [#allocation10]
        %v640 = vld [vmem:[%s639 + $0x2] sm:$0x1]
        %v642 = vrot.slane %v640, 6
        %v644 = vrcp.pop %v642
        %v645 = vmul.f32 %v638, %v644
        %v646 = vld [vmem:[%s322 + $0x3] sm:$0x1]
        %v647 = vmul.f32 %v646, %v610
        %v649 = vrot.slane %v647, 5
        %v651 = vsub.f32 %v464, %v649
        %v652 = vld [vmem:[%s617 + $0x3] sm:$0x1]
        %v653 = vmul.f32 %v652, %v632
        %v655 = vrot.slane %v653, 5
        %v657 = vsub.f32 %v651, %v655
        %v658 = vld [vmem:[%s639 + $0x3] sm:$0x1]
        %v660 = vrot.slane %v645, 2
        %v662 = vmul.f32 %v658, %v660
        %v664 = vrot.slane %v662, 5
        %v666 = vsub.f32 %v657, %v664
        %s667 = scalar_lea.vmem %s322, 24 [#allocation10]
        %v668 = vld [vmem:[%s667 + $0x3] sm:$0x1]
        %v670 = vrot.slane %v668, 5
        %v672 = vrcp.pop %v670
        %v673 = vmul.f32 %v666, %v672
        %v674 = vld [vmem:[%s322 + $0x4] sm:$0x1]
        %v675 = vmul.f32 %v674, %v610
        %v677 = vrot.slane %v675, 4
        %v679 = vsub.f32 %v464, %v677
        %v680 = vld [vmem:[%s617 + $0x4] sm:$0x1]
        %v681 = vmul.f32 %v680, %v632
        %v683 = vrot.slane %v681, 4
        %v685 = vsub.f32 %v679, %v683
        %v686 = vld [vmem:[%s639 + $0x4] sm:$0x1]
        %v687 = vmul.f32 %v686, %v660
        %v689 = vrot.slane %v687, 4
        %v691 = vsub.f32 %v685, %v689
        %v692 = vld [vmem:[%s667 + $0x4] sm:$0x1]
        %v694 = vrot.slane %v673, 3
        %v696 = vmul.f32 %v692, %v694
        %v698 = vrot.slane %v696, 4
        %v700 = vsub.f32 %v691, %v698
        %s701 = scalar_lea.vmem %s322, 32 [#allocation10]
        %v702 = vld [vmem:[%s701 + $0x4] sm:$0x1]
        %v704 = vrot.slane %v702, 4
        %v706 = vrcp.pop %v704
        %v707 = vmul.f32 %v700, %v706
        %v708 = vld [vmem:[%s322 + $0x5] sm:$0x1]
        %v709 = vmul.f32 %v708, %v610
        %v711 = vrot.slane %v709, 3
        %v713 = vsub.f32 %v464, %v711
        %v714 = vld [vmem:[%s617 + $0x5] sm:$0x1]
        %v715 = vmul.f32 %v714, %v632
        %v717 = vrot.slane %v715, 3
        %v719 = vsub.f32 %v713, %v717
        %v720 = vld [vmem:[%s639 + $0x5] sm:$0x1]
        %v721 = vmul.f32 %v720, %v660
        %v723 = vrot.slane %v721, 3
        %v725 = vsub.f32 %v719, %v723
        %v726 = vld [vmem:[%s667 + $0x5] sm:$0x1]
        %v727 = vmul.f32 %v726, %v694
        %v729 = vrot.slane %v727, 3
        %v731 = vsub.f32 %v725, %v729
        %v732 = vld [vmem:[%s701 + $0x5] sm:$0x1]
        %v734 = vrot.slane %v707, 4
        %v736 = vmul.f32 %v732, %v734
        %v738 = vrot.slane %v736, 3
        %v740 = vsub.f32 %v731, %v738
        %s741 = scalar_lea.vmem %s322, 40 [#allocation10]
        %v742 = vld [vmem:[%s741 + $0x5] sm:$0x1]
        %v744 = vrot.slane %v742, 3
        %v746 = vrcp.pop %v744
        %v747 = vmul.f32 %v740, %v746
        %v748 = vld [vmem:[%s322 + $0x6] sm:$0x1]
        %v749 = vmul.f32 %v748, %v610
        %v751 = vrot.slane %v749, 2
        %v753 = vsub.f32 %v464, %v751
        %v754 = vld [vmem:[%s617 + $0x6] sm:$0x1]
        %v755 = vmul.f32 %v754, %v632
        %v757 = vrot.slane %v755, 2
        %v759 = vsub.f32 %v753, %v757
        %v760 = vld [vmem:[%s639 + $0x6] sm:$0x1]
        %v761 = vmul.f32 %v760, %v660
        %v763 = vrot.slane %v761, 2
        %v765 = vsub.f32 %v759, %v763
        %v766 = vld [vmem:[%s667 + $0x6] sm:$0x1]
        %v767 = vmul.f32 %v766, %v694
        %v769 = vrot.slane %v767, 2
        %v771 = vsub.f32 %v765, %v769
        %v772 = vld [vmem:[%s701 + $0x6] sm:$0x1]
        %v773 = vmul.f32 %v772, %v734
        %v775 = vrot.slane %v773, 2
        %v777 = vsub.f32 %v771, %v775
        %v778 = vld [vmem:[%s741 + $0x6] sm:$0x1]
        %v780 = vrot.slane %v747, 5
        %v782 = vmul.f32 %v778, %v780
        %v784 = vrot.slane %v782, 2
        %v786 = vsub.f32 %v777, %v784
        %s787 = scalar_lea.vmem %s322, 48 [#allocation10]
        %v788 = vld [vmem:[%s787 + $0x6] sm:$0x1]
        %v790 = vrot.slane %v788, 2
        %v792 = vrcp.pop %v790
        %v793 = vmul.f32 %v786, %v792
        %v794 = vld [vmem:[%s322 + $0x7] sm:$0x1]
        %v795 = vmul.f32 %v794, %v610
        %v797 = vrot.slane %v795, 1
        %v799 = vsub.f32 %v464, %v797
        %v800 = vld [vmem:[%s617 + $0x7] sm:$0x1]
        %v801 = vmul.f32 %v800, %v632
        %v803 = vrot.slane %v801, 1
        %v805 = vsub.f32 %v799, %v803
        %v806 = vld [vmem:[%s639 + $0x7] sm:$0x1]
        %v807 = vmul.f32 %v806, %v660
        %v809 = vrot.slane %v807, 1
        %v811 = vsub.f32 %v805, %v809
        %v812 = vld [vmem:[%s667 + $0x7] sm:$0x1]
        %v813 = vmul.f32 %v812, %v694
        %v815 = vrot.slane %v813, 1
        %v817 = vsub.f32 %v811, %v815
        %v818 = vld [vmem:[%s701 + $0x7] sm:$0x1]
        %v819 = vmul.f32 %v818, %v734
        %v821 = vrot.slane %v819, 1
        %v823 = vsub.f32 %v817, %v821
        %v824 = vld [vmem:[%s741 + $0x7] sm:$0x1]
        %v825 = vmul.f32 %v824, %v780
        %v827 = vrot.slane %v825, 1
        %v829 = vsub.f32 %v823, %v827
        %v830 = vld [vmem:[%s787 + $0x7] sm:$0x1]
        %v832 = vrot.slane %v793, 6
        %v834 = vmul.f32 %v830, %v832
        %v836 = vrot.slane %v834, 1
        %v838 = vsub.f32 %v829, %v836
        %s839 = scalar_lea.vmem %s322, 56 [#allocation10]
        %v840 = vld [vmem:[%s839 + $0x7] sm:$0x1]
        %v842 = vrot.slane %v840, 1
        %v844 = vrcp.pop %v842
        %v845 = vmul.f32 %v838, %v844
        %v846 = vsub.f32 %v610, %v481
        %v847 = vlaneseq
        %v848 = vshrl.u32 %v847, 7
        %v849 = vsub.s32 0, %v848
        %v850 = vrot.slane %v846, %v849
        %v851 = vmul.f32 %v465, %v850
        %v852 = vmul.f32 %v466, %v850
        %v853 = vmul.f32 %v467, %v850
        %v854 = vmul.f32 %v468, %v850
        %v855 = vadd.f32 %v851, 0.0
        %v856 = vadd.f32 %v852, 0.0
        %v857 = vadd.f32 %v853, 0.0
        %v858 = vadd.f32 %v854, 0.0
        %v859 = vsub.f32 %v623, %v499
        %v860 = vlaneseq
        %v861 = vshrl.u32 %v860, 7
        %v862 = vsub.s32 1, %v861
        %v863 = vrot.slane %v859, %v862
        %v864 = vmul.f32 %v483, %v863
        %v865 = vmul.f32 %v484, %v863
        %v866 = vmul.f32 %v485, %v863
        %v867 = vmul.f32 %v486, %v863
        %v868 = vadd.f32 %v855, %v864
        %v869 = vadd.f32 %v856, %v865
        %v870 = vadd.f32 %v857, %v866
        %v871 = vadd.f32 %v858, %v867
        %v872 = vsub.f32 %v645, %v517
        %v873 = vlaneseq
        %v874 = vshrl.u32 %v873, 7
        %v875 = vsub.s32 2, %v874
        %v876 = vrot.slane %v872, %v875
        %v877 = vmul.f32 %v501, %v876
        %v878 = vmul.f32 %v502, %v876
        %v879 = vmul.f32 %v503, %v876
        %v880 = vmul.f32 %v504, %v876
        %v881 = vadd.f32 %v868, %v877
        %v882 = vadd.f32 %v869, %v878
        %v883 = vadd.f32 %v870, %v879
        %v884 = vadd.f32 %v871, %v880
        %v885 = vsub.f32 %v673, %v535
        %v886 = vlaneseq
        %v887 = vshrl.u32 %v886, 7
        %v888 = vsub.s32 3, %v887
        %v889 = vrot.slane %v885, %v888
        %v890 = vmul.f32 %v519, %v889
        %v891 = vmul.f32 %v520, %v889
        %v892 = vmul.f32 %v521, %v889
        %v893 = vmul.f32 %v522, %v889
        %v894 = vadd.f32 %v881, %v890
        %v895 = vadd.f32 %v882, %v891
        %v896 = vadd.f32 %v883, %v892
        %v897 = vadd.f32 %v884, %v893
        %v898 = vsub.f32 %v707, %v553
        %v899 = vlaneseq
        %v900 = vshrl.u32 %v899, 7
        %v901 = vsub.s32 4, %v900
        %v902 = vrot.slane %v898, %v901
        %v903 = vmul.f32 %v537, %v902
        %v904 = vmul.f32 %v538, %v902
        %v905 = vmul.f32 %v539, %v902
        %v906 = vmul.f32 %v540, %v902
        %v907 = vadd.f32 %v894, %v903
        %v908 = vadd.f32 %v895, %v904
        %v909 = vadd.f32 %v896, %v905
        %v910 = vadd.f32 %v897, %v906
        %v911 = vsub.f32 %v747, %v571
        %v912 = vlaneseq
        %v913 = vshrl.u32 %v912, 7
        %v914 = vsub.s32 5, %v913
        %v915 = vrot.slane %v911, %v914
        %v916 = vmul.f32 %v555, %v915
        %v917 = vmul.f32 %v556, %v915
        %v918 = vmul.f32 %v557, %v915
        %v919 = vmul.f32 %v558, %v915
        %v920 = vadd.f32 %v907, %v916
        %v921 = vadd.f32 %v908, %v917
        %v922 = vadd.f32 %v909, %v918
        %v923 = vadd.f32 %v910, %v919
        %v924 = vsub.f32 %v793, %v589
        %v925 = vlaneseq
        %v926 = vshrl.u32 %v925, 7
        %v927 = vsub.s32 6, %v926
        %v928 = vrot.slane %v924, %v927
        %v929 = vmul.f32 %v573, %v928
        %v930 = vmul.f32 %v574, %v928
        %v931 = vmul.f32 %v575, %v928
        %v932 = vmul.f32 %v576, %v928
        %v933 = vadd.f32 %v920, %v929
        %v934 = vadd.f32 %v921, %v930
        %v935 = vadd.f32 %v922, %v931
        %v936 = vadd.f32 %v923, %v932
        %v937 = vsub.f32 %v845, %v607
        %v938 = vlaneseq
        %v939 = vshrl.u32 %v938, 7
        %v940 = vsub.s32 7, %v939
        %v941 = vrot.slane %v937, %v940
        %v942 = vmul.f32 %v591, %v941
        %v943 = vmul.f32 %v592, %v941
        %v944 = vmul.f32 %v593, %v941
        %v945 = vmul.f32 %v594, %v941
        %v946 = vadd.f32 %v933, %v942
        %v947 = vadd.f32 %v934, %v943
        %v948 = vadd.f32 %v935, %v944
        %v949 = vadd.f32 %v936, %v945
        %v950 = vadd.f32 %v364, %v946
        %v951 = vadd.f32 %v365, %v947
        %v952 = vadd.f32 %v366, %v948
        %v953 = vadd.f32 %v367, %v949
        %954 = vst [vmem:[%s363] sm:$0xff] %v950
        %955 = vst [vmem:[%s363 + $0x8] sm:$0xff] %v951
        %956 = vst [vmem:[%s363 + $0x10] sm:$0xff] %v952
        %957 = vst [vmem:[%s363 + $0x18] sm:$0xff] %v953
        %s958 = sand.u32 %s159, 1
        %s959 = scalar_lea.sflag [#allocation4], %s958
        %s960 = sand.u32 %s159, 1
        %s961 = smul.addr %s960, 32
        %s962 = scalar_lea.vmem [#allocation11], %s961
        // Predicated region
        $region61: #{tpu_custom_call.1} parent=39 // pred_check
          %p963 = pneg %p169
        $region62: #{tpu_custom_call.1} parent=39 // pred_check_branch
          %965 = sbr.rel (%p963) target = $region64
        $region63: #{tpu_custom_call.1} parent=39 // pred_region
          %s967 = ssub.s32 512, 512
          %968 = vsyncadd %s959, %s967
          %s969 = smul.addr %s26, 128
          %s970 = scalar_lea.hbm %s5, %s969
          %s971 = sshll.u32 %s962, 4
          %s972 = int_to_ptr.vmem [resolvable:$true] %s971
          %977 = dma.vmem_to_hbm [thread:$0]  %s972, 512, %s970, %s959, 128, 256, 8
        $region64: #{tpu_custom_call.1} parent=39 // pred_fallthru
          _
      $region40: #{tpu_custom_call.1} parent=5 // pred_fallthru
        _
      %p978 = scmp.le.s32.totalorder 2, %s21
      // Predicated region
      $region65: #{tpu_custom_call.1} parent=5 // pred_check
        %p979 = pneg %p978
      $region66: #{tpu_custom_call.1} parent=5 // pred_check_branch
        %981 = sbr.rel (%p979) target = $region68
      $region67: #{tpu_custom_call.1} parent=5 // pred_region
        %s982 = ssub.s32 %s21, 2
        // Predicated region
        $region69: #{tpu_custom_call.1} parent=67 // pred_check
          %p983 = pneg %p175
        $region70: #{tpu_custom_call.1} parent=67 // pred_check_branch
          %985 = sbr.rel (%p983) target = $region72
        $region71: #{tpu_custom_call.1} parent=67 // pred_region
          %s986 = sand.u32 %s160, 1
          %s987 = scalar_lea.sflag [#allocation4], %s986
          %s988 = sand.u32 %s160, 1
          %s989 = smul.addr %s988, 32
          %s990 = scalar_lea.vmem [#allocation11], %s989
          %991 = dma.done %s987, 512
        $region72: #{tpu_custom_call.1} parent=67 // pred_fallthru
          _
      $region68: #{tpu_custom_call.1} parent=5 // pred_fallthru
        _
    $region6: #{tpu_custom_call.1} parent=1 // loop_footer
      %s25 = sadd.s32 1, %s21
    $region7: #{tpu_custom_call.1} parent=1 // loop_footer_branch
      %20 = sbr.rel target = $region3
    $region8: #{tpu_custom_call.1} parent=1 // loop_exit
      _
    %992 = vsyncpa [#allocation3], 1
    %s993 = scalar_lea.sflag [#allocation3], 1
    %994 = vsyncpa %s993, 1
    %995 = vsyncpa [#allocation6], 1
    %s996 = scalar_lea.sflag [#allocation6], 1
    %997 = vsyncpa %s996, 1
    %998 = vsyncpa [#allocation9], 1
    %s999 = scalar_lea.sflag [#allocation9], 1
    %1000 = vsyncpa %s999, 1
    %1001 = vsyncpa [#allocation4], 1
    %s1002 = scalar_lea.sflag [#allocation4], 1
    %1003 = vsyncpa %s1002, 1

</llo_original>
